<compile_context>
chip_gen: v7x
topology: tpu7x:2x2x1
jax: 0.10.0
libtpu: 0.0.40
codegen_flags: <defaults>
</compile_context>

<pallas_src>
import functools

import jax
import jax.numpy as jnp
from jax.experimental import pallas as pl
from jax.experimental.pallas import tpu as pltpu

_TARGET_BLOCK_BYTES = 4 * 1024 * 1024   # ~4 MiB per pipelined buffer (85%+ of HBM roofline)
_VMEM_LIMIT_BYTES = 48 * 1024 * 1024    # headroom under v7x's 64 MiB physical VMEM


def _sublane_align(dtype):
    return {4: 8, 2: 16, 1: 32}[jnp.dtype(dtype).itemsize]


def _pick_channel_tile(num_channels, bytes_per_channel, align):
    """Largest `align`-multiple channel tile with block size ~<= target, capped at C."""
    if num_channels * bytes_per_channel <= _TARGET_BLOCK_BYTES:
        return num_channels
    tc = (_TARGET_BLOCK_BYTES // bytes_per_channel) // align * align
    tc = max(align, tc)
    return min(tc, num_channels)


def _rms_bn_kernel_2d(x_ref, w_ref, o_ref, norm_ref, *, inv_sqrt_frac, eps):
    # x_ref: (N, TC) -- channels on the lane axis; reduce over the batch (sublane) axis.
    xf = x_ref[...].astype(jnp.float32)
    ssq = jnp.sum(xf * xf, axis=0, keepdims=True)                   # (1, TC), f32 accum
    norm = jnp.sqrt(ssq)                                            # per-channel L2 norm
    scale = (1.0 / (norm * inv_sqrt_frac + eps)) * w_ref[...].astype(jnp.float32)
    out = x_ref[...] * scale.astype(x_ref.dtype)                    # multiply in input dtype
    o_ref[...] = out.astype(o_ref.dtype)
    norm_ref[...] = norm


def _rms_bn_kernel_3d(x_ref, w_ref, o_ref, norm_ref, *, inv_sqrt_frac, eps):
    # x_ref: (N, TC, L) -- channels on the sublane axis; reduce over batch & length.
    xf = x_ref[...].astype(jnp.float32)
    ssq = jnp.sum(xf * xf, axis=2, keepdims=True)                   # (N, TC, 1) lane reduce
    ssq = jnp.sum(ssq, axis=0, keepdims=True)                       # (1, TC, 1) batch reduce
    norm = jnp.sqrt(ssq)                                            # per-channel L2 norm
    w = w_ref[...].astype(jnp.float32)                              # (TC, 1)
    scale = (1.0 / (norm * inv_sqrt_frac + eps)) * w[None]          # (1, TC, 1)
    out = x_ref[...] * scale.astype(x_ref.dtype)                    # multiply in input dtype
    o_ref[...] = out.astype(o_ref.dtype)
    norm_ref[...] = norm[0]                                         # (TC, 1)


def bn1d_scaling_rms(x, weight, running_norm, *, eps=1e-5, momentum=0.1):
    """Training-mode forward of BatchNorm1dScalingRMS.

    Returns (output, new_running_norm). `x` must be rank 2 (N, C) or rank 3 (N, C, L).
    """
    assert x.ndim in (2, 3)
    itemsize = jnp.dtype(x.dtype).itemsize

    if x.ndim == 2:
        N, C = x.shape
        frac = N
        # Channels live on the lane axis -> tile must be a multiple of 128 (or full C).
        tc = _pick_channel_tile(C, N * itemsize, 128)
        kernel = functools.partial(
            _rms_bn_kernel_2d, inv_sqrt_frac=float(frac) ** -0.5, eps=float(eps))
        w2 = weight.reshape(1, C)
        grid = (pl.cdiv(C, tc),)
        in_specs = [
            pl.BlockSpec((N, tc), lambda i: (0, i)),
            pl.BlockSpec((1, tc), lambda i: (0, i)),
        ]
        out_specs = (
            pl.BlockSpec((N, tc), lambda i: (0, i)),
            pl.BlockSpec((1, tc), lambda i: (0, i)),
        )
        out_shape = (
            jax.ShapeDtypeStruct((N, C), x.dtype),
            jax.ShapeDtypeStruct((1, C), jnp.float32),
        )
    else:
        N, C, L = x.shape
        frac = N * L
        # Channels live on the sublane axis -> tile aligned to 8/16/32 (or full C).
        tc = _pick_channel_tile(C, N * L * itemsize, _sublane_align(x.dtype))
        kernel = functools.partial(
            _rms_bn_kernel_3d, inv_sqrt_frac=float(frac) ** -0.5, eps=float(eps))
        w2 = weight.reshape(C, 1)
        grid = (pl.cdiv(C, tc),)
        in_specs = [
            pl.BlockSpec((N, tc, L), lambda i: (0, i, 0)),
            pl.BlockSpec((tc, 1), lambda i: (i, 0)),
        ]
        out_specs = (
            pl.BlockSpec((N, tc, L), lambda i: (0, i, 0)),
            pl.BlockSpec((tc, 1), lambda i: (i, 0)),
        )
        out_shape = (
            jax.ShapeDtypeStruct((N, C, L), x.dtype),
            jax.ShapeDtypeStruct((C, 1), jnp.float32),
        )

    # TODO(synk): add a split-reduction (two-pass) fallback for reduction extents so large
    # that even a minimal-width channel tile cannot stay resident in VMEM.

    out, norm = pl.pallas_call(
        kernel,
        out_shape=out_shape,
        grid=grid,
        in_specs=in_specs,
        out_specs=out_specs,
        compiler_params=pltpu.CompilerParams(
            dimension_semantics=("parallel",),
            vmem_limit_bytes=_VMEM_LIMIT_BYTES,
        ),
    )(x, w2)

    # Running-stats EMA update (tiny (C,) op, outside the hot path).
    norm_flat = norm.reshape(C).astype(running_norm.dtype)
    new_running_norm = (1.0 - momentum) * running_norm + momentum * norm_flat
    return out, new_running_norm


def _reference(x, weight, eps):
    # Pure-JAX reference of the PyTorch forward (training mode).
    if x.ndim == 2:
        frac = x.shape[0]
        norm = jnp.sqrt(jnp.sum(x.astype(jnp.float32) ** 2, axis=0, keepdims=True))
        shape = (1, x.shape[1])
    else:
        frac = x.shape[0] * x.shape[2]
        norm = jnp.sqrt(jnp.sum(x.astype(jnp.float32) ** 2, axis=(0, 2), keepdims=True))
        shape = (1, x.shape[1], 1)
    out = x / (norm / (frac ** 0.5) + eps)
    return (out * weight.reshape(shape)).astype(x.dtype)


if __name__ == "__main__":
    key = jax.random.PRNGKey(0)
    eps = 1e-5
    momentum = 0.1
    k1, k2 = jax.random.split(key)

    # --- 3-D input: (N, C, L) ---
    N, C, L = 2, 4, 16
    x3 = jax.random.normal(k1, (N, C, L), dtype=jnp.float32)
    weight = jnp.ones((C,), dtype=jnp.float32)        # reset_parameters(): weight = 1
    running_norm = jnp.ones((C,), dtype=jnp.float32)  # reset_running_stats(): fill_(1)

    out3, rn3 = bn1d_scaling_rms(x3, weight, running_norm, eps=eps, momentum=momentum)
    out3 = jax.block_until_ready(out3)
    rn3 = jax.block_until_ready(rn3)

    ref3 = _reference(x3, weight, eps)
    assert out3.shape == x3.shape and out3.dtype == x3.dtype
    assert jnp.allclose(out3, ref3, atol=1e-5, rtol=1e-5)

    norm3 = jnp.sqrt(jnp.sum(x3.astype(jnp.float32) ** 2, axis=(0, 2)))
    rn3_ref = (1.0 - momentum) * running_norm + momentum * norm3
    assert jnp.allclose(rn3, rn3_ref, atol=1e-5, rtol=1e-5)

    # --- 2-D input: (N, C) ---
    N2, C2 = 8, 4
    x2 = jax.random.normal(k2, (N2, C2), dtype=jnp.float32)
    weight2 = jnp.ones((C2,), dtype=jnp.float32)
    running_norm2 = jnp.ones((C2,), dtype=jnp.float32)

    out2, rn2 = bn1d_scaling_rms(x2, weight2, running_norm2, eps=eps, momentum=momentum)
    out2 = jax.block_until_ready(out2)
    rn2 = jax.block_until_ready(rn2)

    ref2 = _reference(x2, weight2, eps)
    assert out2.shape == x2.shape and out2.dtype == x2.dtype
    assert jnp.allclose(out2, ref2, atol=1e-5, rtol=1e-5)

    print("KERNEL_OK")
</pallas_src>

<mosaic_0001>
module attributes {stable_mosaic.version = 11 : i64} {
  func.func @_rms_bn_kernel_3d(%arg0: i32, %arg1: memref<2x4x16xf32, #tpu.memory_space<vmem>>, %arg2: memref<4x1xf32, #tpu.memory_space<vmem>>, %arg3: memref<2x4x16xf32, #tpu.memory_space<vmem>>, %arg4: memref<4x1xf32, #tpu.memory_space<vmem>>) attributes {dimension_semantics = [#tpu.dimension_semantics<parallel>], iteration_bounds = array<i64: 1>, scalar_prefetch = 0 : i64, scratch_operands = 0 : i64, tpu.core_type = #tpu.core_type<tc>, window_params = [{transform_indices = @transform_0, window_bounds = array<i64: 2, 4, 16>}, {transform_indices = @transform_1, window_bounds = array<i64: 4, 1>}, {transform_indices = @transform_2, window_bounds = array<i64: 2, 4, 16>}, {transform_indices = @transform_3, window_bounds = array<i64: 4, 1>}]} {
    %c0 = arith.constant 0 : index
    %c0_0 = arith.constant 0 : index
    %c0_1 = arith.constant 0 : index
    %0 = vector.load %arg1[%c0, %c0_0, %c0_1] : memref<2x4x16xf32, #tpu.memory_space<vmem>>, vector<2x4x16xf32>
    %1 = arith.mulf %0, %0 : vector<2x4x16xf32>
    %cst = arith.constant dense<0.000000e+00> : vector<2x4xf32>
    %2 = vector.multi_reduction <add>, %1, %cst [2] : vector<2x4x16xf32> to vector<2x4xf32>
    %3 = vector.shape_cast %2 : vector<2x4xf32> to vector<2x4x1xf32>
    %cst_2 = arith.constant dense<0.000000e+00> : vector<4x1xf32>
    %4 = vector.multi_reduction <add>, %3, %cst_2 [0] : vector<2x4x1xf32> to vector<4x1xf32>
    %5 = vector.shape_cast %4 : vector<4x1xf32> to vector<1x4x1xf32>
    %6 = math.sqrt %5 : vector<1x4x1xf32>
    %c0_3 = arith.constant 0 : index
    %c0_4 = arith.constant 0 : index
    %7 = vector.load %arg2[%c0_3, %c0_4] : memref<4x1xf32, #tpu.memory_space<vmem>>, vector<4x1xf32>
    %cst_5 = arith.constant 0.176776692 : f32
    %8 = vector.broadcast %cst_5 : f32 to vector<1x4x1xf32>
    %9 = arith.mulf %6, %8 : vector<1x4x1xf32>
    %cst_6 = arith.constant 9.99999974E-6 : f32
    %10 = vector.broadcast %cst_6 : f32 to vector<1x4x1xf32>
    %11 = arith.addf %9, %10 : vector<1x4x1xf32>
    %cst_7 = arith.constant 1.000000e+00 : f32
    %12 = vector.broadcast %cst_7 : f32 to vector<1x4x1xf32>
    %13 = arith.divf %12, %11 : vector<1x4x1xf32>
    %14 = vector.shape_cast %7 : vector<4x1xf32> to vector<1x4x1xf32>
    %15 = arith.mulf %13, %14 : vector<1x4x1xf32>
    %c0_8 = arith.constant 0 : index
    %c0_9 = arith.constant 0 : index
    %c0_10 = arith.constant 0 : index
    %16 = vector.load %arg1[%c0_8, %c0_9, %c0_10] : memref<2x4x16xf32, #tpu.memory_space<vmem>>, vector<2x4x16xf32>
    %17 = vector.broadcast %15 : vector<1x4x1xf32> to vector<2x4x16xf32>
    %18 = arith.mulf %16, %17 : vector<2x4x16xf32>
    %c0_11 = arith.constant 0 : index
    %c0_12 = arith.constant 0 : index
    %c0_13 = arith.constant 0 : index
    %19 = vector.load %arg3[%c0_11, %c0_12, %c0_13] : memref<2x4x16xf32, #tpu.memory_space<vmem>>, vector<2x4x16xf32>
    tpu.vector_store %arg3[%c0_11, %c0_12, %c0_13], %18 {strides = array<i32>} : memref<2x4x16xf32, #tpu.memory_space<vmem>>, vector<2x4x16xf32>,
    %20 = vector.shape_cast %6 : vector<1x4x1xf32> to vector<4x1xf32>
    %c0_14 = arith.constant 0 : index
    %c0_15 = arith.constant 0 : index
    %21 = vector.load %arg4[%c0_14, %c0_15] : memref<4x1xf32, #tpu.memory_space<vmem>>, vector<4x1xf32>
    tpu.vector_store %arg4[%c0_14, %c0_15], %20 {strides = array<i32>} : memref<4x1xf32, #tpu.memory_space<vmem>>, vector<4x1xf32>,
    return
  }
  func.func @transform_0(%arg0: i32) -> (i32, i32, i32) {
    %c0_i32 = arith.constant 0 : i32
    %c0_i32_0 = arith.constant 0 : i32
    %c0_i32_1 = arith.constant 0 : i32
    return %c0_i32, %arg0, %c0_i32_0 : i32, i32, i32
  }
  func.func @transform_1(%arg0: i32) -> (i32, i32) {
    %c0_i32 = arith.constant 0 : i32
    %c0_i32_0 = arith.constant 0 : i32
    return %arg0, %c0_i32 : i32, i32
  }
  func.func @transform_2(%arg0: i32) -> (i32, i32, i32) {
    %c0_i32 = arith.constant 0 : i32
    %c0_i32_0 = arith.constant 0 : i32
    %c0_i32_1 = arith.constant 0 : i32
    return %c0_i32, %arg0, %c0_i32_0 : i32, i32, i32
  }
  func.func @transform_3(%arg0: i32) -> (i32, i32) {
    %c0_i32 = arith.constant 0 : i32
    %c0_i32_0 = arith.constant 0 : i32
    return %arg0, %c0_i32 : i32, i32
  }
}

</mosaic_0001>

<llo_original>
// kernel: tpu_custom_call.1
$region0: #{tpu_custom_call.1}
  #allocation0 [shape = 'u32[]', space=smem, size = 0x4, offset = 0x4, fixed_abs, tag = 'smem constant byte address 0x4 - core index']
  #allocation1 [shape = 'u32[144,128]{1,0:T(1,128)}', space=vmem, size = 0x12000, scoped, tag = 'internal scratch']
  %s0 = inlined_call_operand.hbm [shape: f32[2,4,16], index: 0, kind: input, shape index: {}]
  %s1 = inlined_call_operand.vmem [shape: f32[4,1], index: 1, kind: input, shape index: {}]
  %s2 = inlined_call_operand.hbm [shape: f32[2,4,16], index: 2, kind: output, shape index: {0}]
  %s3 = inlined_call_operand.vmem [shape: f32[4,1], index: 3, kind: output, shape index: {1}]
  %4 = xla_tuple %s2, %s3
  %s5 = sld [smem:[#allocation0]]
  $region30: #{tpu_custom_call.1} parent=0
    _
  %s7 = ssub.s32 1, %s5
  %s8 = scalar_select 0, %s7, %s5
  $region1: #{tpu_custom_call.1} parent=0
    #allocation2 [shape = 'u8[4096]{0}', space=vmem, size = 0x1000, scoped, tag = 'input window, operand 0, single buffered']
    #allocation3 [shape = 's32[1]{0}', space=sflag, size = 0x4, scoped, tag = 'scoped memory for tpu_custom_call.1']
    #allocation4 [shape = 's32[1]{0}', space=sflag, size = 0x4, scoped, tag = 'scoped memory for tpu_custom_call.1']
    #allocation5 [shape = 'u8[4096]{0}', space=vmem, size = 0x1000, scoped, tag = 'output window, operand 0, single buffered']
    %9 = vsyncpa [#allocation3], 0
    %10 = vsyncpa [#allocation4], 0
    // Predicated region
    $region2: #{tpu_custom_call.1} parent=1 // pred_check
      _
    $region3: #{tpu_custom_call.1} parent=1 // pred_check_branch
      %12 = sbr.rel (0) target = $region5
    $region4: #{tpu_custom_call.1} parent=1 // pred_region
      %s14 = ssub.s32 128, 128
      %15 = vsyncadd [#allocation3], %s14
      %s16 = sshll.u32 [#allocation2], 4
      %s17 = int_to_ptr.vmem [resolvable:$true] %s16
      %22 = dma.hbm_to_vmem [thread:$0]  %s0, 128, %s17, [#allocation3], 64, 64, 4
    $region5: #{tpu_custom_call.1} parent=1 // pred_fallthru
      _
    // Predicated region
    $region6: #{tpu_custom_call.1} parent=1 // pred_check
      _
    $region7: #{tpu_custom_call.1} parent=1 // pred_check_branch
      %24 = sbr.rel (0) target = $region9
    $region8: #{tpu_custom_call.1} parent=1 // pred_region
      _
    $region9: #{tpu_custom_call.1} parent=1 // pred_fallthru
      _
    // Predicated region
    $region10: #{tpu_custom_call.1} parent=1 // pred_check
      _
    $region11: #{tpu_custom_call.1} parent=1 // pred_check_branch
      %26 = sbr.rel (0) target = $region13
    $region12: #{tpu_custom_call.1} parent=1 // pred_region
      %27 = dma.done [#allocation3], 128
    $region13: #{tpu_custom_call.1} parent=1 // pred_fallthru
      _
    %v28 = vld [vmem:[#allocation2] sm:$0xf]
    %v29 = vld [vmem:[#allocation2 + $0x4] sm:$0xf]
    %v30 = vmul.f32 %v28, %v28
    %v31 = vmul.f32 %v29, %v29
    %vm32 = vcmask 125952
    %v33 = vsel %vm32, %v30, 0.0
    %34 = vadd.xlane.f32.xlu0 %v33
    %v35 = vpop.xlane.xlu0 %34
    %v36 = vsel %vm32, %v31, 0.0
    %37 = vadd.xlane.f32.xlu0 %v36
    %v38 = vpop.xlane.xlu0 %37
    %vm39 = vcmask 1043456
    %v40 = vsel %vm39, %v35, 0.0
    %v41 = vsel %vm39, %v38, 0.0
    %v42 = vadd.f32 %v40, %v41
    %v43 = vrsqrt.pop %v42
    %v44 = vmul.f32 %v42, %v43
    %vm45 = vcmp.eq.f32.partialorder %v42, inf
    %v46 = vsel %vm45, %v42, %v44
    %vm47 = vcmp.eq.f32.partialorder %v42, 0.0
    %v48 = vand.u32 %v42, 2147483648
    %v49 = vsel %vm47, %v48, %v46
    %v50 = vld [vmem:[%s1] sm:$0xf]
    %v51 = vmul.f32 %v49, 0.17677669
    %v52 = vadd.f32 %v51, 1e-05
    %v53 = vrcp.pop %v52
    %v54 = vmul.f32 1.0, %v53
    %v55 = vmul.f32 %v54, %v50
    %57 = vset.pattern.permute.xlu0 0
    %58 = vperm.xlu0 %57, %v55
    %v59 = vpop.permute.xlu0 %58
    %v61 = vmul.f32 %v28, %v59
    %v62 = vmul.f32 %v29, %v59
    %63 = vst.msk [vmem:[#allocation5] sm:$0xf] %vm32, %v61
    %64 = vst.msk [vmem:[#allocation5 + $0x4] sm:$0xf] %vm32, %v62
    %vm65 = vcmask 3072
    %66 = vst.msk [vmem:[%s3] sm:$0xf] %vm65, %v49
    // Predicated region
    $region14: #{tpu_custom_call.1} parent=1 // pred_check
      _
    $region15: #{tpu_custom_call.1} parent=1 // pred_check_branch
      %68 = sbr.rel (0) target = $region17
    $region16: #{tpu_custom_call.1} parent=1 // pred_region
      %s70 = ssub.s32 128, 128
      %71 = vsyncadd [#allocation4], %s70
      %s72 = sshll.u32 [#allocation5], 4
      %s73 = int_to_ptr.vmem [resolvable:$true] %s72
      %78 = dma.vmem_to_hbm [thread:$0]  %s73, 128, %s2, [#allocation4], 64, 64, 4
    $region17: #{tpu_custom_call.1} parent=1 // pred_fallthru
      _
    // Predicated region
    $region18: #{tpu_custom_call.1} parent=1 // pred_check
      _
    $region19: #{tpu_custom_call.1} parent=1 // pred_check_branch
      %80 = sbr.rel (0) target = $region21
    $region20: #{tpu_custom_call.1} parent=1 // pred_region
      _
    $region21: #{tpu_custom_call.1} parent=1 // pred_fallthru
      _
    // Predicated region
    $region22: #{tpu_custom_call.1} parent=1 // pred_check
      _
    $region23: #{tpu_custom_call.1} parent=1 // pred_check_branch
      %82 = sbr.rel (0) target = $region25
    $region24: #{tpu_custom_call.1} parent=1 // pred_region
      %83 = dma.done [#allocation4], 128
    $region25: #{tpu_custom_call.1} parent=1 // pred_fallthru
      _
    // Predicated region
    $region26: #{tpu_custom_call.1} parent=1 // pred_check
      _
    $region27: #{tpu_custom_call.1} parent=1 // pred_check_branch
      %85 = sbr.rel (0) target = $region29
    $region28: #{tpu_custom_call.1} parent=1 // pred_region
      _
    $region29: #{tpu_custom_call.1} parent=1 // pred_fallthru
      _
    %86 = vsyncpa [#allocation3], 1
    %87 = vsyncpa [#allocation4], 1

</llo_original>
